<compile_context>
chip_gen: v7x
topology: tpu7x:2x2x1
jax: 0.10.0
libtpu: 0.0.40
codegen_flags: <defaults>
</compile_context>

<pallas_src>
import jax
import jax.numpy as jnp
from jax.experimental import pallas as pl
from jax.experimental.pallas import tpu as pltpu


def _feature_transform_kernel(x_ref, w_ref, b_ref, o_ref):
    # x_ref: (TILE_M, F), w_ref: (F, H), b_ref: (1, H), o_ref: (TILE_M, H)
    acc = jnp.dot(x_ref[...], w_ref[...], preferred_element_type=jnp.float32)
    acc = acc + b_ref[...]                      # broadcast (1, H) over rows
    o_ref[...] = jnp.tanh(acc).astype(o_ref.dtype)


def _round_up(a, b):
    return (a + b - 1) // b * b


def feature_transformation(z, weight, bias, *, tile_m=4096):
    """z: (..., num_features); weight: (num_features, hidden); bias: (hidden,)."""
    orig_shape = z.shape
    F_dim = orig_shape[-1]
    H = weight.shape[1]

    x2d = z.reshape(-1, F_dim)
    M = x2d.shape[0]
    b2d = bias.reshape(1, H)

    # --- Tile selection -------------------------------------------------------
    # Cap at the sublane-rounded row count so tiny inputs use one small block.
    # (BlockSpec rows must be a multiple of 8 when they don't equal the full dim.)
    tile_m = max(8, min(tile_m, _round_up(M, 8)))
    # For large-but-single-tile M, split into >= 2 grid steps so v7x's two
    # TensorCores both get work under dimension_semantics=("parallel",).
    if M >= 2048:
        tile_m = min(tile_m, _round_up(pl.cdiv(M, 2), 8))

    grid_m = pl.cdiv(M, tile_m)  # boundary block clipped by Pallas; no wrapper pad

    # --- VMEM budget ----------------------------------------------------------
    # The (tile_m, F) x block lane-pads to 128 lanes, so each x buffer costs
    # tile_m * 128 * itemsize, same as the out buffer. Both are double-buffered,
    # plus an f32 (tile_m, H) matmul temp and the resident weight/bias.
    x_itemsize = jnp.dtype(z.dtype).itemsize
    o_itemsize = x_itemsize
    w_itemsize = jnp.dtype(weight.dtype).itemsize
    lanes = 128
    x_buf = tile_m * lanes * x_itemsize
    o_buf = tile_m * H * o_itemsize
    acc_tmp = tile_m * H * 4
    w_buf = _round_up(F_dim, 8) * _round_up(H, lanes) * w_itemsize
    vmem_needed = 2 * (x_buf + o_buf) + acc_tmp + 2 * w_buf + (1 << 16)
    vmem_limit = min(int(vmem_needed * 1.25) + (1 << 20), 48 << 20)

    # Advisory cost model (real M, real itemsizes) for XLA scheduling.
    cost = pl.CostEstimate(
        flops=2 * M * F_dim * H,
        transcendentals=M * H,
        bytes_accessed=(M * F_dim * x_itemsize
                        + M * H * o_itemsize
                        + (F_dim * H + H) * w_itemsize),
    )

    out = pl.pallas_call(
        _feature_transform_kernel,
        out_shape=jax.ShapeDtypeStruct((M, H), z.dtype),
        grid_spec=pl.GridSpec(
            grid=(grid_m,),
            in_specs=[
                pl.BlockSpec((tile_m, F_dim), lambda i: (i, 0)),  # x tile, pipelined over M
                pl.BlockSpec((F_dim, H), lambda i: (0, 0)),       # weight, VMEM-resident
                pl.BlockSpec((1, H), lambda i: (0, 0)),           # bias, VMEM-resident
            ],
            out_specs=pl.BlockSpec((tile_m, H), lambda i: (i, 0)),  # lane-dense (H=128)
        ),
        compiler_params=pltpu.CompilerParams(
            dimension_semantics=("parallel",),   # megacore sharding on v7x
            vmem_limit_bytes=vmem_limit,
        ),
        cost_estimate=cost,
    )(x2d, weight, b2d)

    return out.reshape(*orig_shape[:-1], H)


if __name__ == "__main__":
    num_features = 11
    hidden_layer = 128

    key = jax.random.PRNGKey(0)
    k_x, k_w, k_b, k_x2 = jax.random.split(key, 4)

    # Deterministic parameter init mimicking nn.Linear default
    # (U[-1/sqrt(fan_in), 1/sqrt(fan_in)]).
    bound = 1.0 / (num_features ** 0.5)
    weight = jax.random.uniform(
        k_w, (num_features, hidden_layer), dtype=jnp.float32, minval=-bound, maxval=bound
    )
    bias = jax.random.uniform(
        k_b, (hidden_layer,), dtype=jnp.float32, minval=-bound, maxval=bound
    )

    # Small example input: (batch=2, seq=8, num_features=11) -> M=16, single tile.
    z = jax.random.normal(k_x, (2, 8, num_features), dtype=jnp.float32)
    out = feature_transformation(z, weight, bias)
    out = jax.block_until_ready(out)
    ref = jnp.tanh(z @ weight + bias)
    assert out.shape == (2, 8, hidden_layer)
    assert jnp.allclose(out, ref, atol=1e-5, rtol=1e-5)

    # Exercise the non-divisible (clipped boundary block) path:
    # M = 120 rows with tile_m=64 -> grid of 2 blocks, last block partially valid.
    z2 = jax.random.normal(k_x2, (3, 40, num_features), dtype=jnp.float32)
    out2 = feature_transformation(z2, weight, bias, tile_m=64)
    out2 = jax.block_until_ready(out2)
    ref2 = jnp.tanh(z2 @ weight + bias)
    assert out2.shape == (3, 40, hidden_layer)
    assert jnp.allclose(out2, ref2, atol=1e-5, rtol=1e-5)

    print("KERNEL_OK")
</pallas_src>

<mosaic_0001>
module attributes {stable_mosaic.version = 11 : i64} {
  func.func @_feature_transform_kernel(%arg0: i32, %arg1: memref<16x11xf32, #tpu.memory_space<vmem>>, %arg2: memref<11x128xf32, #tpu.memory_space<vmem>>, %arg3: memref<1x128xf32, #tpu.memory_space<vmem>>, %arg4: memref<16x128xf32, #tpu.memory_space<vmem>>) attributes {dimension_semantics = [#tpu.dimension_semantics<parallel>], iteration_bounds = array<i64: 1>, scalar_prefetch = 0 : i64, scratch_operands = 0 : i64, tpu.core_type = #tpu.core_type<tc>, window_params = [{transform_indices = @transform_0, window_bounds = array<i64: 16, 11>}, {pipeline_mode = #tpu.pipeline_mode<synchronous>, transform_indices = @transform_1, window_bounds = array<i64: 11, 128>}, {pipeline_mode = #tpu.pipeline_mode<synchronous>, transform_indices = @transform_2, window_bounds = array<i64: 1, 128>}, {transform_indices = @transform_3, window_bounds = array<i64: 16, 128>}]} {
    %c0 = arith.constant 0 : index
    %c0_0 = arith.constant 0 : index
    %0 = vector.load %arg1[%c0, %c0_0] : memref<16x11xf32, #tpu.memory_space<vmem>>, vector<16x11xf32>
    %c0_1 = arith.constant 0 : index
    %c0_2 = arith.constant 0 : index
    %1 = vector.load %arg2[%c0_1, %c0_2] : memref<11x128xf32, #tpu.memory_space<vmem>>, vector<11x128xf32>
    %cst = arith.constant dense<0.000000e+00> : vector<16x128xf32>
    %2 = tpu.matmul %0, %1, %cst {dimension_numbers = #tpu.dot_dimension_numbers<[1], [0], [0], [1], [0, 0, 1, 1], [], []>} : vector<16x11xf32>, vector<11x128xf32>, vector<16x128xf32> -> vector<16x128xf32>
    %c0_3 = arith.constant 0 : index
    %c0_4 = arith.constant 0 : index
    %3 = vector.load %arg3[%c0_3, %c0_4] : memref<1x128xf32, #tpu.memory_space<vmem>>, vector<1x128xf32>
    %4 = vector.broadcast %3 : vector<1x128xf32> to vector<16x128xf32>
    %5 = arith.addf %2, %4 : vector<16x128xf32>
    %6 = math.tanh %5 : vector<16x128xf32>
    %c0_5 = arith.constant 0 : index
    %c0_6 = arith.constant 0 : index
    %7 = vector.load %arg4[%c0_5, %c0_6] : memref<16x128xf32, #tpu.memory_space<vmem>>, vector<16x128xf32>
    tpu.vector_store %arg4[%c0_5, %c0_6], %6 {strides = array<i32>} : memref<16x128xf32, #tpu.memory_space<vmem>>, vector<16x128xf32>,
    return
  }
  func.func @transform_0(%arg0: i32) -> (i32, i32) {
    %c0_i32 = arith.constant 0 : i32
    %c0_i32_0 = arith.constant 0 : i32
    return %arg0, %c0_i32 : i32, i32
  }
  func.func @transform_1(%arg0: i32) -> (i32, i32) {
    %c0_i32 = arith.constant 0 : i32
    %c0_i32_0 = arith.constant 0 : i32
    %c0_i32_1 = arith.constant 0 : i32
    return %c0_i32, %c0_i32_0 : i32, i32
  }
  func.func @transform_2(%arg0: i32) -> (i32, i32) {
    %c0_i32 = arith.constant 0 : i32
    %c0_i32_0 = arith.constant 0 : i32
    %c0_i32_1 = arith.constant 0 : i32
    return %c0_i32, %c0_i32_0 : i32, i32
  }
  func.func @transform_3(%arg0: i32) -> (i32, i32) {
    %c0_i32 = arith.constant 0 : i32
    %c0_i32_0 = arith.constant 0 : i32
    return %arg0, %c0_i32 : i32, i32
  }
}

</mosaic_0001>

<llo_original>
// kernel: tpu_custom_call.1
$region0: #{tpu_custom_call.1}
  #allocation0 [shape = 'u32[]', space=smem, size = 0x4, offset = 0x4, fixed_abs, tag = 'smem constant byte address 0x4 - core index']
  #allocation1 [shape = 'u32[144,128]{1,0:T(1,128)}', space=vmem, size = 0x12000, scoped, tag = 'internal scratch']
  %s0 = inlined_call_operand.hbm [shape: f32[16,11], index: 0, kind: input, shape index: {}]
  %s1 = inlined_call_operand.hbm [shape: f32[11,128], index: 1, kind: input, shape index: {}]
  %s2 = inlined_call_operand.vmem [shape: f32[1,128], index: 2, kind: input, shape index: {}]
  %s3 = inlined_call_operand.hbm [shape: f32[16,128], index: 3, kind: output, shape index: {}]
  %s4 = sld [smem:[#allocation0]]
  $region30: #{tpu_custom_call.1} parent=0
    _
  %s6 = ssub.s32 1, %s4
  %s7 = scalar_select 0, %s6, %s4
  $region1: #{tpu_custom_call.1} parent=0
    #allocation2 [shape = 'u8[8192]{0}', space=vmem, size = 0x2000, scoped, tag = 'input window, operand 0, single buffered']
    #allocation3 [shape = 's32[1]{0}', space=sflag, size = 0x4, scoped, tag = 'scoped memory for tpu_custom_call.1']
    #allocation4 [shape = 's32[1]{0}', space=sflag, size = 0x4, scoped, tag = 'scoped memory for tpu_custom_call.1']
    #allocation5 [shape = 'u8[8192]{0}', space=vmem, size = 0x2000, scoped, tag = 'input window, operand 1, single buffered']
    #allocation6 [shape = 's32[1]{0}', space=sflag, size = 0x4, scoped, tag = 'scoped memory for tpu_custom_call.1']
    #allocation7 [shape = 'u8[8192]{0}', space=vmem, size = 0x2000, scoped, tag = 'output window, operand 0, single buffered']
    %8 = vsyncpa [#allocation3], 0
    %9 = vsyncpa [#allocation6], 0
    %10 = vsyncpa [#allocation4], 0
    // Predicated region
    $region2: #{tpu_custom_call.1} parent=1 // pred_check
      _
    $region3: #{tpu_custom_call.1} parent=1 // pred_check_branch
      %12 = sbr.rel (0) target = $region5
    $region4: #{tpu_custom_call.1} parent=1 // pred_region
      %s14 = ssub.s32 256, 256
      %15 = vsyncadd [#allocation3], %s14
      %s16 = sshll.u32 [#allocation2], 4
      %s17 = int_to_ptr.vmem [resolvable:$true] %s16
      %22 = dma.hbm_to_vmem [thread:$0]  %s0, 256, %s17, [#allocation3], 128, 128, 8
    $region5: #{tpu_custom_call.1} parent=1 // pred_fallthru
      _
    // Predicated region
    $region6: #{tpu_custom_call.1} parent=1 // pred_check
      _
    $region7: #{tpu_custom_call.1} parent=1 // pred_check_branch
      %24 = sbr.rel (0) target = $region9
    $region8: #{tpu_custom_call.1} parent=1 // pred_region
      %s26 = ssub.s32 256, 256
      %27 = vsyncadd [#allocation6], %s26
      %s28 = sshll.u32 [#allocation5], 4
      %s29 = int_to_ptr.vmem [resolvable:$true] %s28
      %34 = dma.hbm_to_vmem [thread:$0]  %s1, 256, %s29, [#allocation6], 128, 128, 8
    $region9: #{tpu_custom_call.1} parent=1 // pred_fallthru
      _
    // Predicated region
    $region10: #{tpu_custom_call.1} parent=1 // pred_check
      _
    $region11: #{tpu_custom_call.1} parent=1 // pred_check_branch
      %36 = sbr.rel (0) target = $region13
    $region12: #{tpu_custom_call.1} parent=1 // pred_region
      _
    $region13: #{tpu_custom_call.1} parent=1 // pred_fallthru
      _
    // Predicated region
    $region14: #{tpu_custom_call.1} parent=1 // pred_check
      _
    $region15: #{tpu_custom_call.1} parent=1 // pred_check_branch
      %38 = sbr.rel (0) target = $region17
    $region16: #{tpu_custom_call.1} parent=1 // pred_region
      %39 = dma.done [#allocation3], 256
    $region17: #{tpu_custom_call.1} parent=1 // pred_fallthru
      _
    // Predicated region
    $region18: #{tpu_custom_call.1} parent=1 // pred_check
      _
    $region19: #{tpu_custom_call.1} parent=1 // pred_check_branch
      %41 = sbr.rel (0) target = $region21
    $region20: #{tpu_custom_call.1} parent=1 // pred_region
      %42 = dma.done [#allocation6], 256
    $region21: #{tpu_custom_call.1} parent=1 // pred_fallthru
      _
    %v43 = vld [vmem:[#allocation2] sm:$0xff]
    %v44 = vld [vmem:[#allocation2 + $0x8] sm:$0xff]
    %v45 = vld [vmem:[#allocation5] sm:$0xff]
    %v46 = vld [vmem:[#allocation5 + $0x8] sm:$0x7]
    %v47 = vld [vmem:[%s2] sm:$0x1]
    %v49 = vlaneseq
    %v50 = vshrl.u32 %v49, 7
    %v51 = vsub.s32 0, %v50
    %v52 = vrot.slane %v47, %v51
    %vm54 = vcmask 89088
    %v56 = vsel %vm54, %v43, 0
    %v59 = vsel %vm54, %v44, 0
    %vm61 = vcmask 1042432
    %v63 = vsel %vm61, %v46, 0
    %65 = vmatprep.subr.mxu0 0.0
    %66 = vmatpush1.msra.mxu0 %v45
    %67 = vmatprep.subr.mxu0 0.0
    %68 = vmatpush1.msra.mxu0 %v63
    %69 = vmatprep.subr.mxu0 0.0
    %70 = vmatpush1.msra.mxu0 0.0
    %71 = vmatprep.subr.mxu0 0.0
    %72 = vmatpush1.msra.mxu0 0.0
    %73 = vmatprep.subr.mxu0 0.0
    %74 = vmatpush1.msra.mxu0 0.0
    %75 = vmatprep.subr.mxu0 0.0
    %76 = vmatpush1.msra.mxu0 0.0
    %77 = vmatprep.subr.mxu0 0.0
    %78 = vmatpush1.msra.mxu0 0.0
    %79 = vmatprep.subr.mxu0 0.0
    %80 = vmatpush1.msra.mxu0 0.0
    %81 = vmatprep.subr.mxu0 0.0
    %82 = vmatpush1.msra.mxu0 0.0
    %83 = vmatprep.subr.mxu0 0.0
    %84 = vmatpush1.msra.mxu0 0.0
    %85 = vmatprep.subr.mxu0 0.0
    %86 = vmatpush1.msra.mxu0 0.0
    %87 = vmatprep.subr.mxu0 0.0
    %88 = vmatpush1.msra.mxu0 0.0
    %89 = vmatprep.subr.mxu0 0.0
    %90 = vmatpush1.msra.mxu0 0.0
    %91 = vmatprep.subr.mxu0 0.0
    %92 = vmatpush1.msra.mxu0 0.0
    %93 = vmatprep.subr.mxu0 0.0
    %94 = vmatpush1.msra.mxu0 0.0
    %95 = vmatprep.subr.mxu0 0.0
    %96 = vmatpush1.msra.mxu0 0.0
    %97 = vmatprep.subr.mxu0 0.0
    %98 = vmatpush1.msra.mxu0 0.0
    %99 = vmatprep.subr.mxu0 0.0
    %100 = vmatpush1.msra.mxu0 0.0
    %101 = vmatprep.subr.mxu0 0.0
    %102 = vmatpush1.msra.mxu0 0.0
    %103 = vmatprep.subr.mxu0 0.0
    %104 = vmatpush1.msra.mxu0 0.0
    %105 = vmatprep.subr.mxu0 0.0
    %106 = vmatpush1.msra.mxu0 0.0
    %107 = vmatprep.subr.mxu0 0.0
    %108 = vmatpush1.msra.mxu0 0.0
    %109 = vmatprep.subr.mxu0 0.0
    %110 = vmatpush1.msra.mxu0 0.0
    %111 = vmatprep.subr.mxu0 0.0
    %112 = vmatpush1.msra.mxu0 0.0
    %113 = vmatprep.subr.mxu0 0.0
    %114 = vmatpush1.msra.mxu0 0.0
    %115 = vmatprep.subr.mxu0 0.0
    %116 = vmatpush1.msra.mxu0 0.0
    %117 = vmatprep.subr.mxu0 0.0
    %118 = vmatpush1.msra.mxu0 0.0
    %119 = vmatprep.subr.mxu0 0.0
    %120 = vmatpush1.msra.mxu0 0.0
    %121 = vmatprep.subr.mxu0 0.0
    %122 = vmatpush1.msra.mxu0 0.0
    %123 = vmatprep.subr.mxu0 0.0
    %124 = vmatpush1.msra.mxu0 0.0
    %125 = vmatprep.subr.mxu0 0.0
    %126 = vmatpush1.msra.mxu0 0.0
    %127 = vmatprep.subr.mxu0 0.0
    %128 = vmatpush1.msra.mxu0 0.0
    %129 = vmatprep.mubr.f32.mxu0 0.0
    %130 = vmatmul.mubr.f32.gmra.mrb[0].mxu0 %v56
    %v131 = vpop.f32.mrb[0].mxu0
    %v132 = vadd.f32 %v52, %v131
    %v133 = vpop.f32.mrb[0].mxu0
    %134 = vmatprep.mubr.f32.mxu0 0.0
    %135 = vmatmul.mubr.f32.gmra.mrb[0].mxu0 %v59
    %v136 = vpop.f32.mrb[0].mxu0
    %v137 = vadd.f32 %v52, %v136
    %v138 = vpop.f32.mrb[0].mxu0
    %139 = vdwg.mxu0
    %v140 = vtanh.pop %v132
    %v141 = vtanh.pop %v137
    %142 = vst [vmem:[#allocation7] sm:$0xff] %v140
    %143 = vst [vmem:[#allocation7 + $0x8] sm:$0xff] %v141
    // Predicated region
    $region22: #{tpu_custom_call.1} parent=1 // pred_check
      _
    $region23: #{tpu_custom_call.1} parent=1 // pred_check_branch
      %145 = sbr.rel (0) target = $region25
    $region24: #{tpu_custom_call.1} parent=1 // pred_region
      %s147 = ssub.s32 256, 256
      %148 = vsyncadd [#allocation4], %s147
      %s149 = sshll.u32 [#allocation7], 4
      %s150 = int_to_ptr.vmem [resolvable:$true] %s149
      %155 = dma.vmem_to_hbm [thread:$0]  %s150, 256, %s3, [#allocation4], 128, 128, 8
    $region25: #{tpu_custom_call.1} parent=1 // pred_fallthru
      _
    // Predicated region
    $region26: #{tpu_custom_call.1} parent=1 // pred_check
      _
    $region27: #{tpu_custom_call.1} parent=1 // pred_check_branch
      %157 = sbr.rel (0) target = $region29
    $region28: #{tpu_custom_call.1} parent=1 // pred_region
      %158 = dma.done [#allocation4], 256
    $region29: #{tpu_custom_call.1} parent=1 // pred_fallthru
      _
    %159 = vsyncpa [#allocation3], 1
    %160 = vsyncpa [#allocation6], 1
    %161 = vsyncpa [#allocation4], 1

</llo_original>
